<compile_context>
chip_gen: v7x
topology: tpu7x:2x2x1
jax: 0.10.0
libtpu: 0.0.40
codegen_flags: <defaults>
</compile_context>

<pallas_src>
import math
from functools import partial

import jax
import jax.numpy as jnp
import numpy as np
from jax.experimental import pallas as pl
from jax.experimental.pallas import tpu as pltpu

_LANES = 128  # pad pooled output to full lane width for a dense store


def _adaptive_bounds(in_size, out_size):
    """Start/end indices used by torch adaptive average pooling."""
    starts = [(i * in_size) // out_size for i in range(out_size)]
    ends = [math.ceil((i + 1) * in_size / out_size) for i in range(out_size)]
    return starts, ends


def _pool_matrix_np(in_size, out_size):
    """(in_size, out_size) matrix; column j averages torch's adaptive bin j."""
    starts, ends = _adaptive_bounds(in_size, out_size)
    m = np.zeros((in_size, out_size), np.float32)
    for j in range(out_size):
        m[starts[j]:ends[j], j] = 1.0 / (ends[j] - starts[j])
    return m


def _routing_kernel(x_ref, w1_ref, b1_ref, w2_ref, b2_ref, pool_ref, o_ref):
    x = x_ref[...]          # (Bt, C, N, HW)  float32
    w1 = w1_ref[...]        # (1, C, N, HW)   pre-broadcast
    b1 = b1_ref[...]        # (1, C, 1, HW)
    w2 = w2_ref[...]        # (1, C, N, HW)
    b2 = b2_ref[...]        # (1, C, N, 1)
    pool = pool_ref[...]    # (HW, 128)  lane-padded; 1/count folded in

    Bt, C, N, HW = x.shape

    # conv1 (grouped 1x1 Conv2d): contract capsule dim N (sublane reduce).
    caps_logits = jnp.sum(x * w1, axis=2, keepdims=True) + b1      # (Bt,C,1,HW)
    # softmax over capsule-channel axis C; divide -> EUP vrcp.
    m1 = jnp.max(caps_logits, axis=1, keepdims=True)
    e1 = jnp.exp(caps_logits - m1)
    caps_mask = e1 * pl.reciprocal(
        jnp.sum(e1, axis=1, keepdims=True), approx=True)           # (Bt,C,1,HW)

    xm = caps_mask * x                                             # (Bt,C,N,HW)

    # conv2 (grouped 1x1 Conv1d): contract flattened spatial axis (lane reduce).
    vec_logits = jnp.sum(xm * w2, axis=3, keepdims=True) + b2      # (Bt,C,N,1)
    m2 = jnp.max(vec_logits, axis=1, keepdims=True)
    e2 = jnp.exp(vec_logits - m2)
    vec_mask = e2 * pl.reciprocal(
        jnp.sum(e2, axis=1, keepdims=True), approx=True)           # (Bt,C,N,1)

    xv = vec_mask * xm                                             # (Bt,C,N,HW)

    # Adaptive average pooling (H,W)->(w_out,w_out) as a SINGLE MXU matmul
    # with the lane-padded pooling matrix: (Bt*C*N, HW) @ (HW, 128).
    # Leading-dim collapse only (minor dim unchanged, N is sublane-aligned).
    pooled = jnp.dot(xv.reshape(Bt * C * N, HW), pool,
                     preferred_element_type=jnp.float32)           # (Mt, 128)

    o_ref[...] = pooled.astype(o_ref.dtype)     # one lane-dense full-width store


def _pick_batch_tile(B, rows_per_batch):
    """Batch tile: single step when small; otherwise >=256 MXU rows per step.

    256 rows fills the v6e/v7x 256x256 MXU M dim (>=128 suffices on v5e) and
    gives BlockSpec double-buffering something to overlap."""
    if B * rows_per_batch < 2 * 256:
        return B
    for bt in range(1, B + 1):
        if B % bt == 0 and bt * rows_per_batch >= 256:
            return bt
    # TODO(synk): for huge prime B add padding so a tile fits v7x's 64 MiB VMEM.
    return B


@partial(jax.jit, static_argnames=("w_out",))
def self_attention_routing(x, w1, b1, w2, b2, *, w_out):
    """x: (B, ch_in, n_in, w_in, w_in); w1: (ch_in, n_in); b1: (ch_in,);
    w2: (ch_in, w_in*w_in) [p = h*W + w, row-major]; b2: (ch_in,)."""
    B, C, N, H, W = x.shape
    HW = H * W
    P = w_out * w_out
    assert P <= _LANES

    x4 = x.reshape(B, C, N, HW).astype(jnp.float32)

    # Pre-broadcast tiny constants to full sublane/lane extent so the in-kernel
    # masking multiplies are plain vreg-aligned VPU ops.
    w1r = jnp.broadcast_to(w1.reshape(1, C, N, 1).astype(jnp.float32),
                           (1, C, N, HW))
    b1r = jnp.broadcast_to(b1.reshape(1, C, 1, 1).astype(jnp.float32),
                           (1, C, 1, HW))
    w2r = jnp.broadcast_to(w2.reshape(1, C, 1, HW).astype(jnp.float32),
                           (1, C, N, HW))
    b2r = jnp.broadcast_to(b2.reshape(1, C, 1, 1).astype(jnp.float32),
                           (1, C, N, 1))

    # (HW, 128) lane-padded adaptive-pool matrix (torch bin semantics), with
    # the averaging 1/count folded in.  Built at trace time; jit caches it.
    pool_np = np.zeros((HW, _LANES), np.float32)
    pool_np[:, :P] = np.kron(_pool_matrix_np(H, w_out),
                             _pool_matrix_np(W, w_out))
    pool = jnp.asarray(pool_np)

    rows_per_batch = C * N
    bt = _pick_batch_tile(B, rows_per_batch)
    grid = (B // bt,)
    mt = bt * rows_per_batch        # output rows per grid step

    out = pl.pallas_call(
        _routing_kernel,
        out_shape=jax.ShapeDtypeStruct((B * rows_per_batch, _LANES), x.dtype),
        grid=grid,
        in_specs=[
            pl.BlockSpec((bt, C, N, HW), lambda i: (i, 0, 0, 0)),
            pl.BlockSpec((1, C, N, HW), lambda i: (0, 0, 0, 0)),
            pl.BlockSpec((1, C, 1, HW), lambda i: (0, 0, 0, 0)),
            pl.BlockSpec((1, C, N, HW), lambda i: (0, 0, 0, 0)),
            pl.BlockSpec((1, C, N, 1), lambda i: (0, 0, 0, 0)),
            pl.BlockSpec((HW, _LANES), lambda i: (0, 0)),
        ],
        out_specs=pl.BlockSpec((mt, _LANES), lambda i: (i, 0)),
        compiler_params=pltpu.CompilerParams(
            dimension_semantics=("parallel",)),
    )(x4, w1r, b1r, w2r, b2r, pool)

    # Free wrapper-side layout plumbing: drop lane padding, restore 5-D shape.
    return out[:, :P].reshape(B, C, N, w_out, w_out)


# ---------------- pure-JAX reference (for correctness check) ----------------

def reference(x, w1, b1, w2, b2, w_out):
    B, C, N, H, W = x.shape
    caps_logits = jnp.einsum('bcnhw,cn->bchw', x, w1) + b1[None, :, None, None]
    caps = jax.nn.softmax(caps_logits, axis=1)
    xm = caps[:, :, None, :, :] * x
    vec_logits = (jnp.einsum('bcnhw,chw->bcn', xm, w2.reshape(C, H, W))
                  + b2[None, :, None])
    vec = jax.nn.softmax(vec_logits, axis=1)
    xv = vec[:, :, :, None, None] * xm
    ph = jnp.asarray(_pool_matrix_np(H, w_out))
    pw = jnp.asarray(_pool_matrix_np(W, w_out))
    return jnp.einsum('bcnhw,hi,wj->bcnij', xv, ph, pw)


if __name__ == "__main__":
    B, ch_in, n_in, w_in, w_out = 2, 4, 8, 8, 4

    key = jax.random.PRNGKey(0)
    kx, k1, k2, k3, k4 = jax.random.split(key, 5)

    x = jax.random.normal(kx, (B, ch_in, n_in, w_in, w_in), jnp.float32)
    # conv1: Conv2d(ch_in*n_in, ch_in, k=1, groups=ch_in) -> weight (ch_in, n_in)
    w1 = jax.random.normal(k1, (ch_in, n_in), jnp.float32) * 0.5
    b1 = jax.random.normal(k2, (ch_in,), jnp.float32) * 0.1
    # conv2: Conv1d(ch_in*w_in*w_in, ch_in, k=1, groups=ch_in) -> (ch_in, w_in*w_in)
    w2 = jax.random.normal(k3, (ch_in, w_in * w_in), jnp.float32) * 0.5
    b2 = jax.random.normal(k4, (ch_in,), jnp.float32) * 0.1

    out = jax.block_until_ready(
        self_attention_routing(x, w1, b1, w2, b2, w_out=w_out))
    ref = jax.block_until_ready(reference(x, w1, b1, w2, b2, w_out))

    # approx reciprocal (EUP vrcp) in both softmaxes -> slightly looser tol.
    np.testing.assert_allclose(np.asarray(out), np.asarray(ref),
                               rtol=2e-3, atol=2e-3)

    print("KERNEL_OK")
</pallas_src>

<mosaic_0001>
module attributes {stable_mosaic.version = 11 : i64} {
  func.func @_routing_kernel(%arg0: i32, %arg1: memref<2x4x8x64xf32, #tpu.memory_space<vmem>>, %arg2: memref<1x4x8x64xf32, #tpu.memory_space<vmem>>, %arg3: memref<1x4x1x64xf32, #tpu.memory_space<vmem>>, %arg4: memref<1x4x8x64xf32, #tpu.memory_space<vmem>>, %arg5: memref<1x4x8x1xf32, #tpu.memory_space<vmem>>, %arg6: memref<64x128xf32, #tpu.memory_space<vmem>>, %arg7: memref<64x128xf32, #tpu.memory_space<vmem>>) attributes {dimension_semantics = [#tpu.dimension_semantics<parallel>], iteration_bounds = array<i64: 1>, scalar_prefetch = 0 : i64, scratch_operands = 0 : i64, tpu.core_type = #tpu.core_type<tc>, window_params = [{transform_indices = @transform_0, window_bounds = array<i64: 2, 4, 8, 64>}, {pipeline_mode = #tpu.pipeline_mode<synchronous>, transform_indices = @transform_1, window_bounds = array<i64: 1, 4, 8, 64>}, {pipeline_mode = #tpu.pipeline_mode<synchronous>, transform_indices = @transform_2, window_bounds = array<i64: 1, 4, 1, 64>}, {pipeline_mode = #tpu.pipeline_mode<synchronous>, transform_indices = @transform_3, window_bounds = array<i64: 1, 4, 8, 64>}, {pipeline_mode = #tpu.pipeline_mode<synchronous>, transform_indices = @transform_4, window_bounds = array<i64: 1, 4, 8, 1>}, {pipeline_mode = #tpu.pipeline_mode<synchronous>, transform_indices = @transform_5, window_bounds = array<i64: 64, 128>}, {transform_indices = @transform_6, window_bounds = array<i64: 64, 128>}]} {
    %c0 = arith.constant 0 : index
    %c0_0 = arith.constant 0 : index
    %c0_1 = arith.constant 0 : index
    %c0_2 = arith.constant 0 : index
    %0 = vector.load %arg1[%c0, %c0_0, %c0_1, %c0_2] : memref<2x4x8x64xf32, #tpu.memory_space<vmem>>, vector<2x4x8x64xf32>
    %c0_3 = arith.constant 0 : index
    %c0_4 = arith.constant 0 : index
    %c0_5 = arith.constant 0 : index
    %c0_6 = arith.constant 0 : index
    %1 = vector.load %arg2[%c0_3, %c0_4, %c0_5, %c0_6] : memref<1x4x8x64xf32, #tpu.memory_space<vmem>>, vector<1x4x8x64xf32>
    %c0_7 = arith.constant 0 : index
    %c0_8 = arith.constant 0 : index
    %c0_9 = arith.constant 0 : index
    %c0_10 = arith.constant 0 : index
    %2 = vector.load %arg3[%c0_7, %c0_8, %c0_9, %c0_10] : memref<1x4x1x64xf32, #tpu.memory_space<vmem>>, vector<1x4x1x64xf32>
    %c0_11 = arith.constant 0 : index
    %c0_12 = arith.constant 0 : index
    %c0_13 = arith.constant 0 : index
    %c0_14 = arith.constant 0 : index
    %3 = vector.load %arg4[%c0_11, %c0_12, %c0_13, %c0_14] : memref<1x4x8x64xf32, #tpu.memory_space<vmem>>, vector<1x4x8x64xf32>
    %c0_15 = arith.constant 0 : index
    %c0_16 = arith.constant 0 : index
    %c0_17 = arith.constant 0 : index
    %c0_18 = arith.constant 0 : index
    %4 = vector.load %arg5[%c0_15, %c0_16, %c0_17, %c0_18] : memref<1x4x8x1xf32, #tpu.memory_space<vmem>>, vector<1x4x8x1xf32>
    %c0_19 = arith.constant 0 : index
    %c0_20 = arith.constant 0 : index
    %5 = vector.load %arg6[%c0_19, %c0_20] : memref<64x128xf32, #tpu.memory_space<vmem>>, vector<64x128xf32>
    %6 = vector.broadcast %1 : vector<1x4x8x64xf32> to vector<2x4x8x64xf32>
    %7 = arith.mulf %0, %6 : vector<2x4x8x64xf32>
    %cst = arith.constant dense<0.000000e+00> : vector<2x4x64xf32>
    %8 = vector.multi_reduction <add>, %7, %cst [2] : vector<2x4x8x64xf32> to vector<2x4x64xf32>
    %9 = vector.shape_cast %8 : vector<2x4x64xf32> to vector<2x4x1x64xf32>
    %10 = vector.broadcast %2 : vector<1x4x1x64xf32> to vector<2x4x1x64xf32>
    %11 = arith.addf %9, %10 : vector<2x4x1x64xf32>
    %cst_21 = arith.constant dense<0xFF800000> : vector<2x1x64xf32>
    %12 = vector.multi_reduction <maximumf>, %11, %cst_21 [1] : vector<2x4x1x64xf32> to vector<2x1x64xf32>
    %13 = vector.shape_cast %12 : vector<2x1x64xf32> to vector<2x1x1x64xf32>
    %14 = vector.broadcast %13 : vector<2x1x1x64xf32> to vector<2x4x1x64xf32>
    %15 = arith.subf %11, %14 : vector<2x4x1x64xf32>
    %16 = math.exp %15 : vector<2x4x1x64xf32>
    %cst_22 = arith.constant dense<0.000000e+00> : vector<2x1x64xf32>
    %17 = vector.multi_reduction <add>, %16, %cst_22 [1] : vector<2x4x1x64xf32> to vector<2x1x64xf32>
    %18 = vector.shape_cast %17 : vector<2x1x64xf32> to vector<2x1x1x64xf32>
    %19 = tpu.reciprocal %18 {approx = true} : vector<2x1x1x64xf32> -> vector<2x1x1x64xf32>
    %20 = vector.broadcast %19 : vector<2x1x1x64xf32> to vector<2x4x1x64xf32>
    %21 = arith.mulf %16, %20 : vector<2x4x1x64xf32>
    %22 = vector.broadcast %21 : vector<2x4x1x64xf32> to vector<2x4x8x64xf32>
    %23 = arith.mulf %22, %0 : vector<2x4x8x64xf32>
    %24 = vector.broadcast %3 : vector<1x4x8x64xf32> to vector<2x4x8x64xf32>
    %25 = arith.mulf %23, %24 : vector<2x4x8x64xf32>
    %cst_23 = arith.constant dense<0.000000e+00> : vector<2x4x8xf32>
    %26 = vector.multi_reduction <add>, %25, %cst_23 [3] : vector<2x4x8x64xf32> to vector<2x4x8xf32>
    %27 = vector.shape_cast %26 : vector<2x4x8xf32> to vector<2x4x8x1xf32>
    %28 = vector.broadcast %4 : vector<1x4x8x1xf32> to vector<2x4x8x1xf32>
    %29 = arith.addf %27, %28 : vector<2x4x8x1xf32>
    %cst_24 = arith.constant dense<0xFF800000> : vector<2x8x1xf32>
    %30 = vector.multi_reduction <maximumf>, %29, %cst_24 [1] : vector<2x4x8x1xf32> to vector<2x8x1xf32>
    %31 = vector.shape_cast %30 : vector<2x8x1xf32> to vector<2x1x8x1xf32>
    %32 = vector.broadcast %31 : vector<2x1x8x1xf32> to vector<2x4x8x1xf32>
    %33 = arith.subf %29, %32 : vector<2x4x8x1xf32>
    %34 = math.exp %33 : vector<2x4x8x1xf32>
    %cst_25 = arith.constant dense<0.000000e+00> : vector<2x8x1xf32>
    %35 = vector.multi_reduction <add>, %34, %cst_25 [1] : vector<2x4x8x1xf32> to vector<2x8x1xf32>
    %36 = vector.shape_cast %35 : vector<2x8x1xf32> to vector<2x1x8x1xf32>
    %37 = tpu.reciprocal %36 {approx = true} : vector<2x1x8x1xf32> -> vector<2x1x8x1xf32>
    %38 = vector.broadcast %37 : vector<2x1x8x1xf32> to vector<2x4x8x1xf32>
    %39 = arith.mulf %34, %38 : vector<2x4x8x1xf32>
    %40 = vector.broadcast %39 : vector<2x4x8x1xf32> to vector<2x4x8x64xf32>
    %41 = arith.mulf %40, %23 : vector<2x4x8x64xf32>
    %42 = vector.shape_cast %41 : vector<2x4x8x64xf32> to vector<64x64xf32>
    %cst_26 = arith.constant dense<0.000000e+00> : vector<64x128xf32>
    %43 = tpu.matmul %42, %5, %cst_26 {dimension_numbers = #tpu.dot_dimension_numbers<[1], [0], [0], [1], [0, 0, 1, 1], [], []>} : vector<64x64xf32>, vector<64x128xf32>, vector<64x128xf32> -> vector<64x128xf32>
    %c0_27 = arith.constant 0 : index
    %c0_28 = arith.constant 0 : index
    %44 = vector.load %arg7[%c0_27, %c0_28] : memref<64x128xf32, #tpu.memory_space<vmem>>, vector<64x128xf32>
    tpu.vector_store %arg7[%c0_27, %c0_28], %43 {strides = array<i32>} : memref<64x128xf32, #tpu.memory_space<vmem>>, vector<64x128xf32>,
    return
  }
  func.func @transform_0(%arg0: i32) -> (i32, i32, i32, i32) {
    %c0_i32 = arith.constant 0 : i32
    %c0_i32_0 = arith.constant 0 : i32
    %c0_i32_1 = arith.constant 0 : i32
    %c0_i32_2 = arith.constant 0 : i32
    return %arg0, %c0_i32, %c0_i32_0, %c0_i32_1 : i32, i32, i32, i32
  }
  func.func @transform_1(%arg0: i32) -> (i32, i32, i32, i32) {
    %c0_i32 = arith.constant 0 : i32
    %c0_i32_0 = arith.constant 0 : i32
    %c0_i32_1 = arith.constant 0 : i32
    %c0_i32_2 = arith.constant 0 : i32
    %c0_i32_3 = arith.constant 0 : i32
    return %c0_i32, %c0_i32_0, %c0_i32_1, %c0_i32_2 : i32, i32, i32, i32
  }
  func.func @transform_2(%arg0: i32) -> (i32, i32, i32, i32) {
    %c0_i32 = arith.constant 0 : i32
    %c0_i32_0 = arith.constant 0 : i32
    %c0_i32_1 = arith.constant 0 : i32
    %c0_i32_2 = arith.constant 0 : i32
    %c0_i32_3 = arith.constant 0 : i32
    return %c0_i32, %c0_i32_0, %c0_i32_1, %c0_i32_2 : i32, i32, i32, i32
  }
  func.func @transform_3(%arg0: i32) -> (i32, i32, i32, i32) {
    %c0_i32 = arith.constant 0 : i32
    %c0_i32_0 = arith.constant 0 : i32
    %c0_i32_1 = arith.constant 0 : i32
    %c0_i32_2 = arith.constant 0 : i32
    %c0_i32_3 = arith.constant 0 : i32
    return %c0_i32, %c0_i32_0, %c0_i32_1, %c0_i32_2 : i32, i32, i32, i32
  }
  func.func @transform_4(%arg0: i32) -> (i32, i32, i32, i32) {
    %c0_i32 = arith.constant 0 : i32
    %c0_i32_0 = arith.constant 0 : i32
    %c0_i32_1 = arith.constant 0 : i32
    %c0_i32_2 = arith.constant 0 : i32
    %c0_i32_3 = arith.constant 0 : i32
    return %c0_i32, %c0_i32_0, %c0_i32_1, %c0_i32_2 : i32, i32, i32, i32
  }
  func.func @transform_5(%arg0: i32) -> (i32, i32) {
    %c0_i32 = arith.constant 0 : i32
    %c0_i32_0 = arith.constant 0 : i32
    %c0_i32_1 = arith.constant 0 : i32
    return %c0_i32, %c0_i32_0 : i32, i32
  }
  func.func @transform_6(%arg0: i32) -> (i32, i32) {
    %c0_i32 = arith.constant 0 : i32
    %c0_i32_0 = arith.constant 0 : i32
    return %arg0, %c0_i32 : i32, i32
  }
}

</mosaic_0001>

<llo_original>
// kernel: self_attention_routing.1
$region0: #{self_attention_routing.1}
  #allocation0 [shape = 'u32[]', space=smem, size = 0x4, offset = 0x4, fixed_abs, tag = 'smem constant byte address 0x4 - core index']
  #allocation1 [shape = 'u32[144,128]{1,0:T(1,128)}', space=vmem, size = 0x12000, scoped, tag = 'internal scratch']
  %s0 = inlined_call_operand.vmem [shape: f32[2,4,8,64], index: 0, kind: input, shape index: {}]
  %s1 = inlined_call_operand.vmem [shape: f32[1,4,8,64], index: 1, kind: input, shape index: {}]
  %s2 = inlined_call_operand.vmem [shape: f32[1,4,1,64], index: 2, kind: input, shape index: {}]
  %s3 = inlined_call_operand.vmem [shape: f32[1,4,8,64], index: 3, kind: input, shape index: {}]
  %s4 = inlined_call_operand.vmem [shape: f32[1,4,8,1], index: 4, kind: input, shape index: {}]
  %s5 = inlined_call_operand.vmem [shape: f32[64,128], index: 5, kind: input, shape index: {}]
  %s6 = inlined_call_operand.vmem [shape: f32[64,128], index: 6, kind: output, shape index: {}]
  %s7 = sld [smem:[#allocation0]]
  $region34: #{self_attention_routing.1} parent=0
    _
  %s9 = ssub.s32 1, %s7
  %s10 = scalar_select 0, %s9, %s7
  // Predicated region
  $region2: #{self_attention_routing.1} parent=0 // pred_check
    _
  $region3: #{self_attention_routing.1} parent=0 // pred_check_branch
    %12 = sbr.rel (0) target = $region5
  $region4: #{self_attention_routing.1} parent=0 // pred_region
    _
  $region5: #{self_attention_routing.1} parent=0 // pred_fallthru
    _
  // Predicated region
  $region6: #{self_attention_routing.1} parent=0 // pred_check
    _
  $region7: #{self_attention_routing.1} parent=0 // pred_check_branch
    %14 = sbr.rel (0) target = $region9
  $region8: #{self_attention_routing.1} parent=0 // pred_region
    _
  $region9: #{self_attention_routing.1} parent=0 // pred_fallthru
    _
  // Predicated region
  $region10: #{self_attention_routing.1} parent=0 // pred_check
    _
  $region11: #{self_attention_routing.1} parent=0 // pred_check_branch
    %16 = sbr.rel (0) target = $region13
  $region12: #{self_attention_routing.1} parent=0 // pred_region
    _
  $region13: #{self_attention_routing.1} parent=0 // pred_fallthru
    _
  // Predicated region
  $region14: #{self_attention_routing.1} parent=0 // pred_check
    _
  $region15: #{self_attention_routing.1} parent=0 // pred_check_branch
    %18 = sbr.rel (0) target = $region17
  $region16: #{self_attention_routing.1} parent=0 // pred_region
    _
  $region17: #{self_attention_routing.1} parent=0 // pred_fallthru
    _
  // Predicated region
  $region18: #{self_attention_routing.1} parent=0 // pred_check
    _
  $region19: #{self_attention_routing.1} parent=0 // pred_check_branch
    %20 = sbr.rel (0) target = $region21
  $region20: #{self_attention_routing.1} parent=0 // pred_region
    _
  $region21: #{self_attention_routing.1} parent=0 // pred_fallthru
    _
  // Predicated region
  $region22: #{self_attention_routing.1} parent=0 // pred_check
    _
  $region23: #{self_attention_routing.1} parent=0 // pred_check_branch
    %22 = sbr.rel (0) target = $region25
  $region24: #{self_attention_routing.1} parent=0 // pred_region
    _
  $region25: #{self_attention_routing.1} parent=0 // pred_fallthru
    _
  %v23 = vld [vmem:[%s0] sm:$0xff]
  %v24 = vld [vmem:[%s0 + $0x8] sm:$0xff]
  %v25 = vld [vmem:[%s0 + $0x10] sm:$0xff]
  %v26 = vld [vmem:[%s0 + $0x18] sm:$0xff]
  %v27 = vld [vmem:[%s0 + $0x20] sm:$0xff]
  %v28 = vld [vmem:[%s0 + $0x28] sm:$0xff]
  %v29 = vld [vmem:[%s0 + $0x30] sm:$0xff]
  %v30 = vld [vmem:[%s0 + $0x38] sm:$0xff]
  %v31 = vld [vmem:[%s1] sm:$0xff]
  %v32 = vld [vmem:[%s1 + $0x8] sm:$0xff]
  %v33 = vld [vmem:[%s1 + $0x10] sm:$0xff]
  %v34 = vld [vmem:[%s1 + $0x18] sm:$0xff]
  %v35 = vld [vmem:[%s2] sm:$0x1]
  %v36 = vld [vmem:[%s2 + $0x1] sm:$0x1]
  %v37 = vld [vmem:[%s2 + $0x2] sm:$0x1]
  %v38 = vld [vmem:[%s2 + $0x3] sm:$0x1]
  %v39 = vld [vmem:[%s3] sm:$0xff]
  %v40 = vld [vmem:[%s3 + $0x8] sm:$0xff]
  %v41 = vld [vmem:[%s3 + $0x10] sm:$0xff]
  %v42 = vld [vmem:[%s3 + $0x18] sm:$0xff]
  %v43 = vld [vmem:[%s4] sm:$0xff]
  %v44 = vld [vmem:[%s4 + $0x8] sm:$0xff]
  %v45 = vld [vmem:[%s4 + $0x10] sm:$0xff]
  %v46 = vld [vmem:[%s4 + $0x18] sm:$0xff]
  %v47 = vld [vmem:[%s5] sm:$0xff]
  %v48 = vld [vmem:[%s5 + $0x8] sm:$0xff]
  %v49 = vld [vmem:[%s5 + $0x10] sm:$0xff]
  %v50 = vld [vmem:[%s5 + $0x18] sm:$0xff]
  %v51 = vld [vmem:[%s5 + $0x20] sm:$0xff]
  %v52 = vld [vmem:[%s5 + $0x28] sm:$0xff]
  %v53 = vld [vmem:[%s5 + $0x30] sm:$0xff]
  %v54 = vld [vmem:[%s5 + $0x38] sm:$0xff]
  %v55 = vmul.f32 %v23, %v31
  %v56 = vmul.f32 %v24, %v32
  %v57 = vmul.f32 %v25, %v33
  %v58 = vmul.f32 %v26, %v34
  %v59 = vmul.f32 %v27, %v31
  %v60 = vmul.f32 %v28, %v32
  %v61 = vmul.f32 %v29, %v33
  %v62 = vmul.f32 %v30, %v34
  %vm63 = vcmask 523264
  %v64 = vsel %vm63, %v55, 0.0
  %v65 = vrot.slane %v64, 4
  %v66 = vadd.f32 %v64, %v65
  %v67 = vrot.slane %v66, 2
  %v68 = vadd.f32 %v66, %v67
  %v69 = vrot.slane %v68, 1
  %v70 = vadd.f32 %v68, %v69
  %v71 = vsel %vm63, %v56, 0.0
  %v72 = vrot.slane %v71, 4
  %v73 = vadd.f32 %v71, %v72
  %v74 = vrot.slane %v73, 2
  %v75 = vadd.f32 %v73, %v74
  %v76 = vrot.slane %v75, 1
  %v77 = vadd.f32 %v75, %v76
  %v78 = vsel %vm63, %v57, 0.0
  %v79 = vrot.slane %v78, 4
  %v80 = vadd.f32 %v78, %v79
  %v81 = vrot.slane %v80, 2
  %v82 = vadd.f32 %v80, %v81
  %v83 = vrot.slane %v82, 1
  %v84 = vadd.f32 %v82, %v83
  %v85 = vsel %vm63, %v58, 0.0
  %v86 = vrot.slane %v85, 4
  %v87 = vadd.f32 %v85, %v86
  %v88 = vrot.slane %v87, 2
  %v89 = vadd.f32 %v87, %v88
  %v90 = vrot.slane %v89, 1
  %v91 = vadd.f32 %v89, %v90
  %v92 = vsel %vm63, %v59, 0.0
  %v93 = vrot.slane %v92, 4
  %v94 = vadd.f32 %v92, %v93
  %v95 = vrot.slane %v94, 2
  %v96 = vadd.f32 %v94, %v95
  %v97 = vrot.slane %v96, 1
  %v98 = vadd.f32 %v96, %v97
  %v99 = vsel %vm63, %v60, 0.0
  %v100 = vrot.slane %v99, 4
  %v101 = vadd.f32 %v99, %v100
  %v102 = vrot.slane %v101, 2
  %v103 = vadd.f32 %v101, %v102
  %v104 = vrot.slane %v103, 1
  %v105 = vadd.f32 %v103, %v104
  %v106 = vsel %vm63, %v61, 0.0
  %v107 = vrot.slane %v106, 4
  %v108 = vadd.f32 %v106, %v107
  %v109 = vrot.slane %v108, 2
  %v110 = vadd.f32 %v108, %v109
  %v111 = vrot.slane %v110, 1
  %v112 = vadd.f32 %v110, %v111
  %v113 = vsel %vm63, %v62, 0.0
  %v114 = vrot.slane %v113, 4
  %v115 = vadd.f32 %v113, %v114
  %v116 = vrot.slane %v115, 2
  %v117 = vadd.f32 %v115, %v116
  %v118 = vrot.slane %v117, 1
  %v119 = vadd.f32 %v117, %v118
  %v120 = vadd.f32 %v70, %v35
  %v121 = vadd.f32 %v77, %v36
  %v122 = vadd.f32 %v84, %v37
  %v123 = vadd.f32 %v91, %v38
  %v124 = vadd.f32 %v98, %v35
  %v125 = vadd.f32 %v105, %v36
  %v126 = vadd.f32 %v112, %v37
  %v127 = vadd.f32 %v119, %v38
  %vm128 = vcmask 516096
  %v129 = vsel %vm128, %v120, -inf
  %v130 = vsel %vm128, %v121, -inf
  %v131 = vsel %vm128, %v122, -inf
  %v132 = vmax.f32 %v129, %v131
  %v133 = vsel %vm128, %v123, -inf
  %v134 = vmax.f32 %v130, %v133
  %v135 = vmax.f32 %v132, %v134
  %v136 = vsel %vm128, %v124, -inf
  %v137 = vsel %vm128, %v125, -inf
  %v138 = vsel %vm128, %v126, -inf
  %v139 = vmax.f32 %v136, %v138
  %v140 = vsel %vm128, %v127, -inf
  %v141 = vmax.f32 %v137, %v140
  %v142 = vmax.f32 %v139, %v141
  %v143 = vsub.f32 %v120, %v135
  %v144 = vsub.f32 %v121, %v135
  %v145 = vsub.f32 %v122, %v135
  %v146 = vsub.f32 %v123, %v135
  %v147 = vsub.f32 %v124, %v142
  %v148 = vsub.f32 %v125, %v142
  %v149 = vsub.f32 %v126, %v142
  %v150 = vsub.f32 %v127, %v142
  %v151 = vmul.f32 %v143, 1.442695
  %v152 = vpow.pop %v151
  %v153 = vmul.f32 %v144, 1.442695
  %v154 = vpow.pop %v153
  %v155 = vmul.f32 %v145, 1.442695
  %v156 = vpow.pop %v155
  %v157 = vmul.f32 %v146, 1.442695
  %v158 = vpow.pop %v157
  %v159 = vmul.f32 %v147, 1.442695
  %v160 = vpow.pop %v159
  %v161 = vmul.f32 %v148, 1.442695
  %v162 = vpow.pop %v161
  %v163 = vmul.f32 %v149, 1.442695
  %v164 = vpow.pop %v163
  %v165 = vmul.f32 %v150, 1.442695
  %v166 = vpow.pop %v165
  %v167 = vsel %vm128, %v152, 0.0
  %v168 = vsel %vm128, %v154, 0.0
  %v169 = vadd.f32 %v167, %v168
  %v170 = vsel %vm128, %v156, 0.0
  %v171 = vadd.f32 %v169, %v170
  %v172 = vsel %vm128, %v158, 0.0
  %v173 = vadd.f32 %v171, %v172
  %v174 = vsel %vm128, %v160, 0.0
  %v175 = vsel %vm128, %v162, 0.0
  %v176 = vadd.f32 %v174, %v175
  %v177 = vsel %vm128, %v164, 0.0
  %v178 = vadd.f32 %v176, %v177
  %v179 = vsel %vm128, %v166, 0.0
  %v180 = vadd.f32 %v178, %v179
  %v181 = vrcp.pop %v173
  %v182 = vrcp.pop %v180
  %v183 = vmul.f32 %v152, %v181
  %v184 = vmul.f32 %v154, %v181
  %v185 = vmul.f32 %v156, %v181
  %v186 = vmul.f32 %v158, %v181
  %v187 = vmul.f32 %v160, %v182
  %v188 = vmul.f32 %v162, %v182
  %v189 = vmul.f32 %v164, %v182
  %v190 = vmul.f32 %v166, %v182
  %v191 = vlaneseq
  %v192 = vshrl.u32 %v191, 7
  %v193 = vsub.s32 0, %v192
  %v194 = vrot.slane %v183, %v193
  %v195 = vlaneseq
  %v196 = vshrl.u32 %v195, 7
  %v197 = vsub.s32 0, %v196
  %v198 = vrot.slane %v184, %v197
  %v199 = vlaneseq
  %v200 = vshrl.u32 %v199, 7
  %v201 = vsub.s32 0, %v200
  %v202 = vrot.slane %v185, %v201
  %v203 = vlaneseq
  %v204 = vshrl.u32 %v203, 7
  %v205 = vsub.s32 0, %v204
  %v206 = vrot.slane %v186, %v205
  %v207 = vlaneseq
  %v208 = vshrl.u32 %v207, 7
  %v209 = vsub.s32 0, %v208
  %v210 = vrot.slane %v187, %v209
  %v211 = vlaneseq
  %v212 = vshrl.u32 %v211, 7
  %v213 = vsub.s32 0, %v212
  %v214 = vrot.slane %v188, %v213
  %v215 = vlaneseq
  %v216 = vshrl.u32 %v215, 7
  %v217 = vsub.s32 0, %v216
  %v218 = vrot.slane %v189, %v217
  %v219 = vlaneseq
  %v220 = vshrl.u32 %v219, 7
  %v221 = vsub.s32 0, %v220
  %v222 = vrot.slane %v190, %v221
  %v223 = vmul.f32 %v194, %v23
  %v224 = vmul.f32 %v198, %v24
  %v225 = vmul.f32 %v202, %v25
  %v226 = vmul.f32 %v206, %v26
  %v227 = vmul.f32 %v210, %v27
  %v228 = vmul.f32 %v214, %v28
  %v229 = vmul.f32 %v218, %v29
  %v230 = vmul.f32 %v222, %v30
  %v231 = vmul.f32 %v223, %v39
  %v232 = vmul.f32 %v224, %v40
  %v233 = vmul.f32 %v225, %v41
  %v234 = vmul.f32 %v226, %v42
  %v235 = vmul.f32 %v227, %v39
  %v236 = vmul.f32 %v228, %v40
  %v237 = vmul.f32 %v229, %v41
  %v238 = vmul.f32 %v230, %v42
  %v239 = vsel %vm63, %v231, 0.0
  %240 = vadd.xlane.f32.xlu0 %v239
  %v241 = vpop.xlane.xlu0 %240
  %v242 = vsel %vm63, %v232, 0.0
  %243 = vadd.xlane.f32.xlu0 %v242
  %v244 = vpop.xlane.xlu0 %243
  %v245 = vsel %vm63, %v233, 0.0
  %246 = vadd.xlane.f32.xlu0 %v245
  %v247 = vpop.xlane.xlu0 %246
  %v248 = vsel %vm63, %v234, 0.0
  %249 = vadd.xlane.f32.xlu0 %v248
  %v250 = vpop.xlane.xlu0 %249
  %v251 = vsel %vm63, %v235, 0.0
  %252 = vadd.xlane.f32.xlu0 %v251
  %v253 = vpop.xlane.xlu0 %252
  %v254 = vsel %vm63, %v236, 0.0
  %255 = vadd.xlane.f32.xlu0 %v254
  %v256 = vpop.xlane.xlu0 %255
  %v257 = vsel %vm63, %v237, 0.0
  %258 = vadd.xlane.f32.xlu0 %v257
  %v259 = vpop.xlane.xlu0 %258
  %v260 = vsel %vm63, %v238, 0.0
  %261 = vadd.xlane.f32.xlu0 %v260
  %v262 = vpop.xlane.xlu0 %261
  %v263 = vadd.f32 %v241, %v43
  %v264 = vadd.f32 %v244, %v44
  %v265 = vadd.f32 %v247, %v45
  %v266 = vadd.f32 %v250, %v46
  %v267 = vadd.f32 %v253, %v43
  %v268 = vadd.f32 %v256, %v44
  %v269 = vadd.f32 %v259, %v45
  %v270 = vadd.f32 %v262, %v46
  %vm271 = vcmask 7168
  %v272 = vsel %vm271, %v263, -inf
  %v273 = vsel %vm271, %v264, -inf
  %v274 = vsel %vm271, %v265, -inf
  %v275 = vmax.f32 %v272, %v274
  %v276 = vsel %vm271, %v266, -inf
  %v277 = vmax.f32 %v273, %v276
  %v278 = vmax.f32 %v275, %v277
  %v279 = vsel %vm271, %v267, -inf
  %v280 = vsel %vm271, %v268, -inf
  %v281 = vsel %vm271, %v269, -inf
  %v282 = vmax.f32 %v279, %v281
  %v283 = vsel %vm271, %v270, -inf
  %v284 = vmax.f32 %v280, %v283
  %v285 = vmax.f32 %v282, %v284
  %v286 = vsub.f32 %v263, %v278
  %v287 = vsub.f32 %v264, %v278
  %v288 = vsub.f32 %v265, %v278
  %v289 = vsub.f32 %v266, %v278
  %v290 = vsub.f32 %v267, %v285
  %v291 = vsub.f32 %v268, %v285
  %v292 = vsub.f32 %v269, %v285
  %v293 = vsub.f32 %v270, %v285
  %v294 = vmul.f32 %v286, 1.442695
  %v295 = vpow.pop %v294
  %v296 = vmul.f32 %v287, 1.442695
  %v297 = vpow.pop %v296
  %v298 = vmul.f32 %v288, 1.442695
  %v299 = vpow.pop %v298
  %v300 = vmul.f32 %v289, 1.442695
  %v301 = vpow.pop %v300
  %v302 = vmul.f32 %v290, 1.442695
  %v303 = vpow.pop %v302
  %v304 = vmul.f32 %v291, 1.442695
  %v305 = vpow.pop %v304
  %v306 = vmul.f32 %v292, 1.442695
  %v307 = vpow.pop %v306
  %v308 = vmul.f32 %v293, 1.442695
  %v309 = vpow.pop %v308
  %v310 = vsel %vm271, %v295, 0.0
  %v311 = vsel %vm271, %v297, 0.0
  %v312 = vadd.f32 %v310, %v311
  %v313 = vsel %vm271, %v299, 0.0
  %v314 = vadd.f32 %v312, %v313
  %v315 = vsel %vm271, %v301, 0.0
  %v316 = vadd.f32 %v314, %v315
  %v317 = vsel %vm271, %v303, 0.0
  %v318 = vsel %vm271, %v305, 0.0
  %v319 = vadd.f32 %v317, %v318
  %v320 = vsel %vm271, %v307, 0.0
  %v321 = vadd.f32 %v319, %v320
  %v322 = vsel %vm271, %v309, 0.0
  %v323 = vadd.f32 %v321, %v322
  %v324 = vrcp.pop %v316
  %v325 = vrcp.pop %v323
  %v326 = vmul.f32 %v295, %v324
  %v327 = vmul.f32 %v297, %v324
  %v328 = vmul.f32 %v299, %v324
  %v329 = vmul.f32 %v301, %v324
  %v330 = vmul.f32 %v303, %v325
  %v331 = vmul.f32 %v305, %v325
  %v332 = vmul.f32 %v307, %v325
  %v333 = vmul.f32 %v309, %v325
  %335 = vset.pattern.permute.xlu0 0
  %336 = vperm.xlu0 %335, %v326
  %v337 = vpop.permute.xlu0 %336
  %340 = vset.pattern.permute.xlu0 0
  %341 = vperm.xlu0 %340, %v327
  %v342 = vpop.permute.xlu0 %341
  %345 = vset.pattern.permute.xlu0 0
  %346 = vperm.xlu0 %345, %v328
  %v347 = vpop.permute.xlu0 %346
  %350 = vset.pattern.permute.xlu0 0
  %351 = vperm.xlu0 %350, %v329
  %v352 = vpop.permute.xlu0 %351
  %355 = vset.pattern.permute.xlu0 0
  %356 = vperm.xlu0 %355, %v330
  %v357 = vpop.permute.xlu0 %356
  %360 = vset.pattern.permute.xlu0 0
  %361 = vperm.xlu0 %360, %v331
  %v362 = vpop.permute.xlu0 %361
  %365 = vset.pattern.permute.xlu0 0
  %366 = vperm.xlu0 %365, %v332
  %v367 = vpop.permute.xlu0 %366
  %370 = vset.pattern.permute.xlu0 0
  %371 = vperm.xlu0 %370, %v333
  %v372 = vpop.permute.xlu0 %371
  %v374 = vmul.f32 %v337, %v223
  %v375 = vmul.f32 %v342, %v224
  %v376 = vmul.f32 %v347, %v225
  %v377 = vmul.f32 %v352, %v226
  %v378 = vmul.f32 %v357, %v227
  %v379 = vmul.f32 %v362, %v228
  %v380 = vmul.f32 %v367, %v229
  %v381 = vmul.f32 %v372, %v230
  %v383 = vsel %vm63, %v374, 0
  %v386 = vsel %vm63, %v375, 0
  %v389 = vsel %vm63, %v376, 0
  %v392 = vsel %vm63, %v377, 0
  %v395 = vsel %vm63, %v378, 0
  %v398 = vsel %vm63, %v379, 0
  %v401 = vsel %vm63, %v380, 0
  %v404 = vsel %vm63, %v381, 0
  %406 = vmatprep.subr.mxu0 0.0
  %407 = vmatpush1.msra.mxu0 %v47
  %408 = vmatprep.subr.mxu0 0.0
  %409 = vmatpush1.msra.mxu0 %v48
  %410 = vmatprep.subr.mxu0 0.0
  %411 = vmatpush1.msra.mxu0 %v49
  %412 = vmatprep.subr.mxu0 0.0
  %413 = vmatpush1.msra.mxu0 %v50
  %414 = vmatprep.subr.mxu0 0.0
  %415 = vmatpush1.msra.mxu0 %v51
  %416 = vmatprep.subr.mxu0 0.0
  %417 = vmatpush1.msra.mxu0 %v52
  %418 = vmatprep.subr.mxu0 0.0
  %419 = vmatpush1.msra.mxu0 %v53
  %420 = vmatprep.subr.mxu0 0.0
  %421 = vmatpush1.msra.mxu0 %v54
  %422 = vmatprep.subr.mxu0 0.0
  %423 = vmatpush1.msra.mxu0 0.0
  %424 = vmatprep.subr.mxu0 0.0
  %425 = vmatpush1.msra.mxu0 0.0
  %426 = vmatprep.subr.mxu0 0.0
  %427 = vmatpush1.msra.mxu0 0.0
  %428 = vmatprep.subr.mxu0 0.0
  %429 = vmatpush1.msra.mxu0 0.0
  %430 = vmatprep.subr.mxu0 0.0
  %431 = vmatpush1.msra.mxu0 0.0
  %432 = vmatprep.subr.mxu0 0.0
  %433 = vmatpush1.msra.mxu0 0.0
  %434 = vmatprep.subr.mxu0 0.0
  %435 = vmatpush1.msra.mxu0 0.0
  %436 = vmatprep.subr.mxu0 0.0
  %437 = vmatpush1.msra.mxu0 0.0
  %438 = vmatprep.subr.mxu0 0.0
  %439 = vmatpush1.msra.mxu0 0.0
  %440 = vmatprep.subr.mxu0 0.0
  %441 = vmatpush1.msra.mxu0 0.0
  %442 = vmatprep.subr.mxu0 0.0
  %443 = vmatpush1.msra.mxu0 0.0
  %444 = vmatprep.subr.mxu0 0.0
  %445 = vmatpush1.msra.mxu0 0.0
  %446 = vmatprep.subr.mxu0 0.0
  %447 = vmatpush1.msra.mxu0 0.0
  %448 = vmatprep.subr.mxu0 0.0
  %449 = vmatpush1.msra.mxu0 0.0
  %450 = vmatprep.subr.mxu0 0.0
  %451 = vmatpush1.msra.mxu0 0.0
  %452 = vmatprep.subr.mxu0 0.0
  %453 = vmatpush1.msra.mxu0 0.0
  %454 = vmatprep.subr.mxu0 0.0
  %455 = vmatpush1.msra.mxu0 0.0
  %456 = vmatprep.subr.mxu0 0.0
  %457 = vmatpush1.msra.mxu0 0.0
  %458 = vmatprep.subr.mxu0 0.0
  %459 = vmatpush1.msra.mxu0 0.0
  %460 = vmatprep.subr.mxu0 0.0
  %461 = vmatpush1.msra.mxu0 0.0
  %462 = vmatprep.subr.mxu0 0.0
  %463 = vmatpush1.msra.mxu0 0.0
  %464 = vmatprep.subr.mxu0 0.0
  %465 = vmatpush1.msra.mxu0 0.0
  %466 = vmatprep.subr.mxu0 0.0
  %467 = vmatpush1.msra.mxu0 0.0
  %468 = vmatprep.subr.mxu0 0.0
  %469 = vmatpush1.msra.mxu0 0.0
  %470 = vmatprep.mubr.f32.mxu0 0.0
  %471 = vmatmul.mubr.f32.gmra.mrb[0].mxu0 %v383
  %v472 = vpop.f32.mrb[0].mxu0
  %v473 = vadd.f32 0.0, %v472
  %v474 = vpop.f32.mrb[0].mxu0
  %475 = vmatprep.mubr.f32.mxu0 0.0
  %476 = vmatmul.mubr.f32.gmra.mrb[0].mxu0 %v386
  %v477 = vpop.f32.mrb[0].mxu0
  %v478 = vadd.f32 0.0, %v477
  %v479 = vpop.f32.mrb[0].mxu0
  %480 = vmatprep.mubr.f32.mxu0 0.0
  %481 = vmatmul.mubr.f32.gmra.mrb[0].mxu0 %v389
  %v482 = vpop.f32.mrb[0].mxu0
  %v483 = vadd.f32 0.0, %v482
  %v484 = vpop.f32.mrb[0].mxu0
  %485 = vmatprep.mubr.f32.mxu0 0.0
  %486 = vmatmul.mubr.f32.gmra.mrb[0].mxu0 %v392
  %v487 = vpop.f32.mrb[0].mxu0
  %v488 = vadd.f32 0.0, %v487
  %v489 = vpop.f32.mrb[0].mxu0
  %490 = vmatprep.mubr.f32.mxu0 0.0
  %491 = vmatmul.mubr.f32.gmra.mrb[0].mxu0 %v395
  %v492 = vpop.f32.mrb[0].mxu0
  %v493 = vadd.f32 0.0, %v492
  %v494 = vpop.f32.mrb[0].mxu0
  %495 = vmatprep.mubr.f32.mxu0 0.0
  %496 = vmatmul.mubr.f32.gmra.mrb[0].mxu0 %v398
  %v497 = vpop.f32.mrb[0].mxu0
  %v498 = vadd.f32 0.0, %v497
  %v499 = vpop.f32.mrb[0].mxu0
  %500 = vmatprep.mubr.f32.mxu0 0.0
  %501 = vmatmul.mubr.f32.gmra.mrb[0].mxu0 %v401
  %v502 = vpop.f32.mrb[0].mxu0
  %v503 = vadd.f32 0.0, %v502
  %v504 = vpop.f32.mrb[0].mxu0
  %505 = vmatprep.mubr.f32.mxu0 0.0
  %506 = vmatmul.mubr.f32.gmra.mrb[0].mxu0 %v404
  %v507 = vpop.f32.mrb[0].mxu0
  %v508 = vadd.f32 0.0, %v507
  %v509 = vpop.f32.mrb[0].mxu0
  %510 = vdwg.mxu0
  %511 = vst [vmem:[%s6] sm:$0xff] %v473
  %512 = vst [vmem:[%s6 + $0x8] sm:$0xff] %v478
  %513 = vst [vmem:[%s6 + $0x10] sm:$0xff] %v483
  %514 = vst [vmem:[%s6 + $0x18] sm:$0xff] %v488
  %515 = vst [vmem:[%s6 + $0x20] sm:$0xff] %v493
  %516 = vst [vmem:[%s6 + $0x28] sm:$0xff] %v498
  %517 = vst [vmem:[%s6 + $0x30] sm:$0xff] %v503
  %518 = vst [vmem:[%s6 + $0x38] sm:$0xff] %v508
  // Predicated region
  $region26: #{self_attention_routing.1} parent=0 // pred_check
    _
  $region27: #{self_attention_routing.1} parent=0 // pred_check_branch
    %520 = sbr.rel (0) target = $region29
  $region28: #{self_attention_routing.1} parent=0 // pred_region
    _
  $region29: #{self_attention_routing.1} parent=0 // pred_fallthru
    _
  // Predicated region
  $region30: #{self_attention_routing.1} parent=0 // pred_check
    _
  $region31: #{self_attention_routing.1} parent=0 // pred_check_branch
    %522 = sbr.rel (0) target = $region33
  $region32: #{self_attention_routing.1} parent=0 // pred_region
    _
  $region33: #{self_attention_routing.1} parent=0 // pred_fallthru
    _

</llo_original>
